<compile_context>
chip_gen: v5e
topology: v5e:2x2
jax: 0.10.0
libtpu: 0.0.40
codegen_flags: <defaults>
</compile_context>

<pallas_src>
import math
import functools

import jax
import jax.numpy as jnp
from jax.experimental import pallas as pl
from jax.experimental.pallas import tpu as pltpu


def _make_fused_decoder_kernel(num_layers, small_cin_threshold=8):
    """Build a kernel: x_ref (1, C_in, HW), w_refs[i] (cout_i, cin_i), o_ref (1, hidden, HW)."""

    def kernel(x_ref, *args):
        w_refs = args[:num_layers]
        o_ref = args[num_layers]

        h = x_ref[0].astype(jnp.float32)  # (C_in, HW), lane-dense on HW

        for li in range(num_layers):
            w = w_refs[li][...]            # (cout, cin) -- loaded once, tiny
            cout, cin = w.shape
            if cin <= small_cin_threshold:
                # VPU broadcast-FMA path: K is far too small to be worth an MXU pass.
                acc = w[:, 0:1] * h[0:1, :]            # (cout, HW)
                for c in range(1, cin):
                    acc = acc + w[:, c:c + 1] * h[c:c + 1, :]
            else:
                # MXU path: (cout, cin) @ (cin, HW) -> (cout, HW)
                acc = jnp.dot(w, h, preferred_element_type=jnp.float32)
            # ReLU; dropout (inference) == identity
            h = jnp.maximum(acc, 0.0)

        o_ref[0] = h.astype(o_ref.dtype)

    return kernel


def decoder_layers_forward(x_nchw, weights):
    """x_nchw: [B, C, H, W] f32; weights: list of [C_out_i, C_in_i] f32 (PyTorch layout)."""
    B, C, H, W = x_nchw.shape
    HW = H * W
    hidden = weights[0].shape[0]

    x = x_nchw.reshape(B, C, HW)  # NCHW -> [B, C, H*W] is a pure reshape, no transpose

    kernel = _make_fused_decoder_kernel(len(weights))

    out = pl.pallas_call(
        kernel,
        out_shape=jax.ShapeDtypeStruct((B, hidden, HW), x.dtype),
        grid_spec=pltpu.PrefetchScalarGridSpec(
            num_scalar_prefetch=0,
            grid=(B,),
            in_specs=[pl.BlockSpec((1, C, HW), lambda b: (b, 0, 0))]
                     + [pl.BlockSpec(w.shape, lambda b: (0, 0)) for w in weights],
            out_specs=pl.BlockSpec((1, hidden, HW), lambda b: (b, 0, 0)),
        ),
        compiler_params=pltpu.CompilerParams(
            dimension_semantics=("parallel",)),
    )(x, *weights)

    return out.reshape(B, hidden, H, W)  # [B, hidden, H*W] -> NCHW is a pure reshape


def init_conv_weight(key, cin, cout):
    """Matches init_layer for a (cout, cin, 1, 1) Conv2d weight with bias=False:
    n = cin*1*1, std = sqrt(2/n), scale = std*sqrt(3), uniform(-scale, scale).
    Returned in PyTorch [cout, cin] layout (no transpose needed for the kernel)."""
    n = cin * 1 * 1
    std = math.sqrt(2.0 / n)
    scale = std * math.sqrt(3.0)
    return jax.random.uniform(
        key, (cout, cin), minval=-scale, maxval=scale, dtype=jnp.float32)


if __name__ == "__main__":
    # Module hyper-params (small, consistent with the forward pass)
    z_dim = 4
    emb_layers = 2
    hidden_units = 32
    drop_rate = 0.1  # inference mode -> dropout is identity

    B, H, W = 2, 16, 16

    key = jax.random.PRNGKey(0)
    kx, *kws = jax.random.split(key, 1 + emb_layers)

    x = jax.random.normal(kx, (B, z_dim, H, W), dtype=jnp.float32)

    weights = []
    for i in range(emb_layers):
        cin = z_dim if i == 0 else hidden_units
        weights.append(init_conv_weight(kws[i], cin, hidden_units))

    fwd = jax.jit(functools.partial(decoder_layers_forward, weights=weights))
    out = fwd(x)
    jax.block_until_ready(out)

    assert out.shape == (B, hidden_units, H, W), out.shape
    assert out.dtype == jnp.float32
    assert bool(jnp.all(out >= 0.0))  # ReLU post-condition

    # Pure-JAX reference (per-pixel 1x1-conv = channel matmul) for correctness.
    ref = x.reshape(B, z_dim, H * W)
    for w in weights:
        ref = jnp.maximum(jnp.einsum("oi,bix->box", w, ref), 0.0)
    ref = ref.reshape(B, hidden_units, H, W)
    assert bool(jnp.allclose(out, ref, atol=1e-5, rtol=1e-5))

    print("KERNEL_OK")
</pallas_src>

<mosaic_0001>
module attributes {stable_mosaic.version = 11 : i64} {
  func.func @kernel(%arg0: i32, %arg1: memref<1x4x256xf32, #tpu.memory_space<vmem>>, %arg2: memref<32x4xf32, #tpu.memory_space<vmem>>, %arg3: memref<32x32xf32, #tpu.memory_space<vmem>>, %arg4: memref<1x32x256xf32, #tpu.memory_space<vmem>>) attributes {dimension_semantics = [#tpu.dimension_semantics<parallel>], iteration_bounds = array<i64: 2>, scalar_prefetch = 0 : i64, scratch_operands = 0 : i64, tpu.core_type = #tpu.core_type<tc>, window_params = [{transform_indices = @transform_0, window_bounds = array<i64: 1, 4, 256>}, {pipeline_mode = #tpu.pipeline_mode<synchronous>, transform_indices = @transform_1, window_bounds = array<i64: 32, 4>}, {pipeline_mode = #tpu.pipeline_mode<synchronous>, transform_indices = @transform_2, window_bounds = array<i64: 32, 32>}, {transform_indices = @transform_3, window_bounds = array<i64: 1, 32, 256>}]} {
    %c0 = arith.constant 0 : index
    %c0_0 = arith.constant 0 : index
    %c0_1 = arith.constant 0 : index
    %0 = vector.load %arg1[%c0, %c0_0, %c0_1] : memref<1x4x256xf32, #tpu.memory_space<vmem>>, vector<1x4x256xf32>
    %1 = vector.shape_cast %0 : vector<1x4x256xf32> to vector<4x256xf32>
    %c0_2 = arith.constant 0 : index
    %c0_3 = arith.constant 0 : index
    %2 = vector.load %arg2[%c0_2, %c0_3] : memref<32x4xf32, #tpu.memory_space<vmem>>, vector<32x4xf32>
    %3 = vector.extract_strided_slice %2 {offsets = [0, 0], sizes = [32, 1], strides = [1, 1]} : vector<32x4xf32> to vector<32x1xf32>
    %4 = vector.extract_strided_slice %1 {offsets = [0, 0], sizes = [1, 256], strides = [1, 1]} : vector<4x256xf32> to vector<1x256xf32>
    %5 = vector.broadcast %3 : vector<32x1xf32> to vector<32x256xf32>
    %6 = vector.broadcast %4 : vector<1x256xf32> to vector<32x256xf32>
    %7 = arith.mulf %5, %6 : vector<32x256xf32>
    %8 = vector.extract_strided_slice %2 {offsets = [0, 1], sizes = [32, 1], strides = [1, 1]} : vector<32x4xf32> to vector<32x1xf32>
    %9 = vector.extract_strided_slice %1 {offsets = [1, 0], sizes = [1, 256], strides = [1, 1]} : vector<4x256xf32> to vector<1x256xf32>
    %10 = vector.broadcast %8 : vector<32x1xf32> to vector<32x256xf32>
    %11 = vector.broadcast %9 : vector<1x256xf32> to vector<32x256xf32>
    %12 = arith.mulf %10, %11 : vector<32x256xf32>
    %13 = arith.addf %7, %12 : vector<32x256xf32>
    %14 = vector.extract_strided_slice %2 {offsets = [0, 2], sizes = [32, 1], strides = [1, 1]} : vector<32x4xf32> to vector<32x1xf32>
    %15 = vector.extract_strided_slice %1 {offsets = [2, 0], sizes = [1, 256], strides = [1, 1]} : vector<4x256xf32> to vector<1x256xf32>
    %16 = vector.broadcast %14 : vector<32x1xf32> to vector<32x256xf32>
    %17 = vector.broadcast %15 : vector<1x256xf32> to vector<32x256xf32>
    %18 = arith.mulf %16, %17 : vector<32x256xf32>
    %19 = arith.addf %13, %18 : vector<32x256xf32>
    %20 = vector.extract_strided_slice %2 {offsets = [0, 3], sizes = [32, 1], strides = [1, 1]} : vector<32x4xf32> to vector<32x1xf32>
    %21 = vector.extract_strided_slice %1 {offsets = [3, 0], sizes = [1, 256], strides = [1, 1]} : vector<4x256xf32> to vector<1x256xf32>
    %22 = vector.broadcast %20 : vector<32x1xf32> to vector<32x256xf32>
    %23 = vector.broadcast %21 : vector<1x256xf32> to vector<32x256xf32>
    %24 = arith.mulf %22, %23 : vector<32x256xf32>
    %25 = arith.addf %19, %24 : vector<32x256xf32>
    %cst = arith.constant 0.000000e+00 : f32
    %26 = vector.broadcast %cst : f32 to vector<32x256xf32>
    %27 = arith.maximumf %25, %26 : vector<32x256xf32>
    %c0_4 = arith.constant 0 : index
    %c0_5 = arith.constant 0 : index
    %28 = vector.load %arg3[%c0_4, %c0_5] : memref<32x32xf32, #tpu.memory_space<vmem>>, vector<32x32xf32>
    %cst_6 = arith.constant dense<0.000000e+00> : vector<32x256xf32>
    %29 = tpu.matmul %28, %27, %cst_6 {dimension_numbers = #tpu.dot_dimension_numbers<[1], [0], [0], [1], [0, 0, 1, 1], [], []>} : vector<32x32xf32>, vector<32x256xf32>, vector<32x256xf32> -> vector<32x256xf32>
    %cst_7 = arith.constant 0.000000e+00 : f32
    %30 = vector.broadcast %cst_7 : f32 to vector<32x256xf32>
    %31 = arith.maximumf %29, %30 : vector<32x256xf32>
    %c0_8 = arith.constant 0 : index
    %c0_9 = arith.constant 0 : index
    %c0_10 = arith.constant 0 : index
    %32 = vector.load %arg4[%c0_8, %c0_9, %c0_10] : memref<1x32x256xf32, #tpu.memory_space<vmem>>, vector<1x32x256xf32>
    %33 = vector.shape_cast %32 : vector<1x32x256xf32> to vector<32x256xf32>
    %34 = vector.shape_cast %31 : vector<32x256xf32> to vector<1x32x256xf32>
    tpu.vector_store %arg4[%c0_8, %c0_9, %c0_10], %34 {strides = array<i32>} : memref<1x32x256xf32, #tpu.memory_space<vmem>>, vector<1x32x256xf32>,
    return
  }
  func.func @transform_0(%arg0: i32) -> (i32, i32, i32) {
    %c0_i32 = arith.constant 0 : i32
    %c0_i32_0 = arith.constant 0 : i32
    %c0_i32_1 = arith.constant 0 : i32
    return %arg0, %c0_i32, %c0_i32_0 : i32, i32, i32
  }
  func.func @transform_1(%arg0: i32) -> (i32, i32) {
    %c0_i32 = arith.constant 0 : i32
    %c0_i32_0 = arith.constant 0 : i32
    %c0_i32_1 = arith.constant 0 : i32
    return %c0_i32, %c0_i32_0 : i32, i32
  }
  func.func @transform_2(%arg0: i32) -> (i32, i32) {
    %c0_i32 = arith.constant 0 : i32
    %c0_i32_0 = arith.constant 0 : i32
    %c0_i32_1 = arith.constant 0 : i32
    return %c0_i32, %c0_i32_0 : i32, i32
  }
  func.func @transform_3(%arg0: i32) -> (i32, i32, i32) {
    %c0_i32 = arith.constant 0 : i32
    %c0_i32_0 = arith.constant 0 : i32
    %c0_i32_1 = arith.constant 0 : i32
    return %arg0, %c0_i32, %c0_i32_0 : i32, i32, i32
  }
}

</mosaic_0001>

<llo_original>
// kernel: decoder_layers_forward.1
$region0: #{decoder_layers_forward.1}
  #allocation0 [shape = 'u32[]', space=smem, size = 0x4, offset = 0x4, fixed_abs, tag = 'smem constant byte address 0x4 - core index']
  #allocation1 [shape = 'u32[72,128]{1,0:T(1,128)}', space=vmem, size = 0x9000, scoped, tag = 'internal scratch']
  %s0 = inlined_call_operand.vmem [shape: f32[2,4,256], index: 0, kind: input, shape index: {}]
  %s1 = inlined_call_operand.vmem [shape: f32[32,4], index: 1, kind: input, shape index: {}]
  %s2 = inlined_call_operand.vmem [shape: f32[32,32], index: 2, kind: input, shape index: {}]
  %s3 = inlined_call_operand.vmem [shape: f32[2,32,256], index: 3, kind: output, shape index: {}]
  %s4 = sld [smem:[#allocation0]]
  $region45: #{decoder_layers_forward.1} parent=0
    _
  %s6 = ssub.s32 1, %s4
  %s7 = scalar_select 0, %s6, %s4
  loop: start=0, step=1, limit=4
  $region2: #{decoder_layers_forward.1} parent=0 // loop_pre_header
    _
  $region3: #{decoder_layers_forward.1} parent=0 // loop_header
    %s9 = sphi 0, %s13
    %p10 = scmp.ge.s32.totalorder %s9, 4
    %s19 = sphi 0, %s21
    %s22 = sphi 0, %s19
    %s23 = sphi 0, %s22
    %s39 = sphi 0, %s23
    %s43 = sphi 0, %s43
    %s45 = sphi 0, %s43
    %s46 = sphi 0, %s45
    %s60 = sphi 0, %s46
    %s64 = sphi 0, %s64
    %s66 = sphi 0, %s64
    %s67 = sphi 0, %s66
    %s81 = sphi 0, %s67
    %s87 = sphi 0, %s89
    %s90 = sphi 0, %s87
    %s91 = sphi 0, %s90
    %s107 = sphi 0, %s91
  $region4: #{decoder_layers_forward.1} parent=0 // loop_header_branch
    %12 = sbr.rel (%p10) target = $region8
  $region5: #{decoder_layers_forward.1} parent=0 // loop_body
    %s14 = ssub.s32 %s9, 1
    %s15 = ssub.s32 %s9, 2
    %s16 = sadd.s32 %s9, 1
    %s17 = ssub.s32 %s9, %s16
    %p18 = scmp.eq.s32.totalorder %s17, 0
    %s20 = sadd.s32 %s19, 1
    %s21 = scalar_select %p18, %s19, %s20
    %p24 = pneg %p18
    %p25 = scmp.eq.s32.totalorder %s9, 1
    %p26 = por %p24, %p25
    %p27 = scmp.ne.s32.totalorder %s19, %s22
    %p28 = scmp.eq.s32.totalorder %s9, 0
    %p29 = por %p27, %p28
    %p30 = scmp.ne.s32.totalorder %s19, %s22
    %p31 = scmp.eq.s32.totalorder %s14, 1
    %p32 = por %p30, %p31
    %p33 = scmp.ne.s32.totalorder %s22, %s23
    %p34 = scmp.eq.s32.totalorder %s14, 0
    %p35 = por %p33, %p34
    %p36 = scmp.ne.s32.totalorder %s22, %s23
    %p37 = scmp.eq.s32.totalorder %s15, 1
    %p38 = por %p36, %p37
    %p40 = scmp.ne.s32.totalorder %s23, %s39
    %p41 = scmp.eq.s32.totalorder %s15, 0
    %p42 = por %p40, %p41
    %s44 = sadd.s32 %s43, 1
    %p47 = scmp.eq.s32.totalorder %s9, 1
    %p48 = scmp.ne.s32.totalorder %s43, %s45
    %p49 = scmp.eq.s32.totalorder %s9, 0
    %p50 = por %p48, %p49
    %p51 = scmp.ne.s32.totalorder %s43, %s45
    %p52 = scmp.eq.s32.totalorder %s14, 1
    %p53 = por %p51, %p52
    %p54 = scmp.ne.s32.totalorder %s45, %s46
    %p55 = scmp.eq.s32.totalorder %s14, 0
    %p56 = por %p54, %p55
    %p57 = scmp.ne.s32.totalorder %s45, %s46
    %p58 = scmp.eq.s32.totalorder %s15, 1
    %p59 = por %p57, %p58
    %p61 = scmp.ne.s32.totalorder %s46, %s60
    %p62 = scmp.eq.s32.totalorder %s15, 0
    %p63 = por %p61, %p62
    %s65 = sadd.s32 %s64, 1
    %p68 = scmp.eq.s32.totalorder %s9, 1
    %p69 = scmp.ne.s32.totalorder %s64, %s66
    %p70 = scmp.eq.s32.totalorder %s9, 0
    %p71 = por %p69, %p70
    %p72 = scmp.ne.s32.totalorder %s64, %s66
    %p73 = scmp.eq.s32.totalorder %s14, 1
    %p74 = por %p72, %p73
    %p75 = scmp.ne.s32.totalorder %s66, %s67
    %p76 = scmp.eq.s32.totalorder %s14, 0
    %p77 = por %p75, %p76
    %p78 = scmp.ne.s32.totalorder %s66, %s67
    %p79 = scmp.eq.s32.totalorder %s15, 1
    %p80 = por %p78, %p79
    %p82 = scmp.ne.s32.totalorder %s67, %s81
    %p83 = scmp.eq.s32.totalorder %s15, 0
    %p84 = por %p82, %p83
    %s85 = ssub.s32 %s9, %s16
    %p86 = scmp.eq.s32.totalorder %s85, 0
    %s88 = sadd.s32 %s87, 1
    %s89 = scalar_select %p86, %s87, %s88
    %p92 = pneg %p86
    %p93 = scmp.eq.s32.totalorder %s9, 1
    %p94 = por %p92, %p93
    %p95 = scmp.ne.s32.totalorder %s87, %s90
    %p96 = scmp.eq.s32.totalorder %s9, 0
    %p97 = por %p95, %p96
    %p98 = scmp.ne.s32.totalorder %s87, %s90
    %p99 = scmp.eq.s32.totalorder %s14, 1
    %p100 = por %p98, %p99
    %p101 = scmp.ne.s32.totalorder %s90, %s91
    %p102 = scmp.eq.s32.totalorder %s14, 0
    %p103 = por %p101, %p102
    %p104 = scmp.ne.s32.totalorder %s90, %s91
    %p105 = scmp.eq.s32.totalorder %s15, 1
    %p106 = por %p104, %p105
    %p108 = scmp.ne.s32.totalorder %s91, %s107
    %p109 = scmp.eq.s32.totalorder %s15, 0
    %p110 = por %p108, %p109
    %p111 = scmp.le.s32.totalorder 1, %s9
    %p112 = scmp.lt.s32.totalorder %s9, 3
    %p113 = pnand %p111, %p112
    %p114 = pneg %p113
    // Predicated region
    $region9: #{decoder_layers_forward.1} parent=5 // pred_check
      _
    $region10: #{decoder_layers_forward.1} parent=5 // pred_check_branch
      %116 = sbr.rel (%p113) target = $region12
    $region11: #{decoder_layers_forward.1} parent=5 // pred_region
      %s117 = ssub.s32 %s9, 1
      // Predicated region
      $region13: #{decoder_layers_forward.1} parent=11 // pred_check
        %p118 = pneg %p56
      $region14: #{decoder_layers_forward.1} parent=11 // pred_check_branch
        %120 = sbr.rel (%p118) target = $region16
      $region15: #{decoder_layers_forward.1} parent=11 // pred_region
        _
      $region16: #{decoder_layers_forward.1} parent=11 // pred_fallthru
        _
      // Predicated region
      $region17: #{decoder_layers_forward.1} parent=11 // pred_check
        %p121 = pneg %p77
      $region18: #{decoder_layers_forward.1} parent=11 // pred_check_branch
        %123 = sbr.rel (%p121) target = $region20
      $region19: #{decoder_layers_forward.1} parent=11 // pred_region
        _
      $region20: #{decoder_layers_forward.1} parent=11 // pred_fallthru
        _
    $region12: #{decoder_layers_forward.1} parent=5 // pred_fallthru
      _
    %p124 = scmp.lt.s32.totalorder %s9, 2
    // Predicated region
    $region21: #{decoder_layers_forward.1} parent=5 // pred_check
      %p125 = pneg %p124
    $region22: #{decoder_layers_forward.1} parent=5 // pred_check_branch
      %127 = sbr.rel (%p125) target = $region24
    $region23: #{decoder_layers_forward.1} parent=5 // pred_region
      // Predicated region
      $region25: #{decoder_layers_forward.1} parent=23 // pred_check
        %p128 = pneg %p29
      $region26: #{decoder_layers_forward.1} parent=23 // pred_check_branch
        %130 = sbr.rel (%p128) target = $region28
      $region27: #{decoder_layers_forward.1} parent=23 // pred_region
        %p131 = scmp.lt.s32.totalorder %s9, 1
        %s132 = scalar_select %p131, %s9, 1
        %s133 = smul.addr %s132, 2
        %s134 = smul.addr %s133, 4
        %s135 = scalar_lea.vmem %s0, %s134
      $region28: #{decoder_layers_forward.1} parent=23 // pred_fallthru
        _
    $region24: #{decoder_layers_forward.1} parent=5 // pred_fallthru
      _
    %p136 = scmp.le.s32.totalorder 1, %s9
    %p137 = scmp.lt.s32.totalorder %s9, 3
    %p138 = pnand %p136, %p137
    %p139 = pneg %p138
    // Predicated region
    $region29: #{decoder_layers_forward.1} parent=5 // pred_check
      _
    $region30: #{decoder_layers_forward.1} parent=5 // pred_check_branch
      %141 = sbr.rel (%p138) target = $region32
    $region31: #{decoder_layers_forward.1} parent=5 // pred_region
      %s142 = ssub.s32 %s9, 1
      %p143 = scmp.lt.s32.totalorder %s14, 1
      %s144 = scalar_select %p143, %s14, 1
      %s145 = smul.addr %s144, 2
      %s146 = smul.addr %s145, 4
      %s147 = scalar_lea.vmem %s0, %s146
      %p148 = pneg %p35
      %p149 = pneg %p32
      %p150 = pneg %p56
      %p151 = pneg %p53
      %p152 = pneg %p77
      %p153 = pneg %p74
      %p154 = pneg %p103
      %p155 = pneg %p100
      %p156 = scmp.lt.s32.totalorder %s14, 1
      %s157 = scalar_select %p156, %s14, 1
      %s158 = smul.addr %s157, 8
      %s159 = smul.addr %s158, 8
      %s160 = scalar_lea.vmem %s3, %s159
      %p161 = scmp.lt.s32.totalorder %s14, 1
      %s162 = scalar_select %p161, %s14, 1
      %s163 = smul.addr %s162, 2
      %s164 = smul.addr %s163, 4
      %s165 = scalar_lea.vmem %s0, %s164
      %p166 = scmp.lt.s32.totalorder %s14, 1
      %s167 = scalar_select %p166, %s14, 1
      %s168 = smul.addr %s167, 8
      %s169 = smul.addr %s168, 8
      %s170 = scalar_lea.vmem %s3, %s169
      %v171 = vld [vmem:[%s165] sm:$0xff]
      %v172 = vld [vmem:[%s1] sm:$0xff]
      %v173 = vld [vmem:[%s1 + $0x8] sm:$0xff]
      %v174 = vld [vmem:[%s1 + $0x10] sm:$0xff]
      %v175 = vld [vmem:[%s1 + $0x18] sm:$0xff]
      %177 = vset.pattern.permute.xlu0 0
      %178 = vperm.xlu0 %177, %v172
      %v179 = vpop.permute.xlu0 %178
      %182 = vset.pattern.permute.xlu0 0
      %183 = vperm.xlu0 %182, %v173
      %v184 = vpop.permute.xlu0 %183
      %187 = vset.pattern.permute.xlu0 0
      %188 = vperm.xlu0 %187, %v174
      %v189 = vpop.permute.xlu0 %188
      %192 = vset.pattern.permute.xlu0 0
      %193 = vperm.xlu0 %192, %v175
      %v194 = vpop.permute.xlu0 %193
      %v197 = vperm.slane %v171, 0
      %v198 = vperm.slane %v171, 4
      %v201 = vperm.slane %v197, 0
      %v202 = vperm.slane %v198, 0
      %v203 = vmul.f32 %v179, %v201
      %v204 = vmul.f32 %v179, %v202
      %v205 = vmul.f32 %v184, %v201
      %v206 = vmul.f32 %v184, %v202
      %v207 = vmul.f32 %v189, %v201
      %v208 = vmul.f32 %v189, %v202
      %v209 = vmul.f32 %v194, %v201
      %v210 = vmul.f32 %v194, %v202
      %211 = vset.pattern.permute.xlu0 1
      %212 = vperm.xlu0 %211, %v172
      %v213 = vpop.permute.xlu0 %212
      %215 = vset.pattern.permute.xlu0 1
      %216 = vperm.xlu0 %215, %v173
      %v217 = vpop.permute.xlu0 %216
      %219 = vset.pattern.permute.xlu0 1
      %220 = vperm.xlu0 %219, %v174
      %v221 = vpop.permute.xlu0 %220
      %223 = vset.pattern.permute.xlu0 1
      %224 = vperm.xlu0 %223, %v175
      %v225 = vpop.permute.xlu0 %224
      %v227 = vperm.slane %v171, 1
      %v228 = vperm.slane %v171, 5
      %v231 = vperm.slane %v227, 1
      %v232 = vperm.slane %v228, 1
      %v233 = vmul.f32 %v213, %v231
      %v234 = vmul.f32 %v213, %v232
      %v235 = vmul.f32 %v217, %v231
      %v236 = vmul.f32 %v217, %v232
      %v237 = vmul.f32 %v221, %v231
      %v238 = vmul.f32 %v221, %v232
      %v239 = vmul.f32 %v225, %v231
      %v240 = vmul.f32 %v225, %v232
      %v241 = vadd.f32 %v203, %v233
      %v242 = vadd.f32 %v204, %v234
      %v243 = vadd.f32 %v205, %v235
      %v244 = vadd.f32 %v206, %v236
      %v245 = vadd.f32 %v207, %v237
      %v246 = vadd.f32 %v208, %v238
      %v247 = vadd.f32 %v209, %v239
      %v248 = vadd.f32 %v210, %v240
      %249 = vset.pattern.permute.xlu0 2
      %250 = vperm.xlu0 %249, %v172
      %v251 = vpop.permute.xlu0 %250
      %253 = vset.pattern.permute.xlu0 2
      %254 = vperm.xlu0 %253, %v173
      %v255 = vpop.permute.xlu0 %254
      %257 = vset.pattern.permute.xlu0 2
      %258 = vperm.xlu0 %257, %v174
      %v259 = vpop.permute.xlu0 %258
      %261 = vset.pattern.permute.xlu0 2
      %262 = vperm.xlu0 %261, %v175
      %v263 = vpop.permute.xlu0 %262
      %v265 = vperm.slane %v171, 2
      %v266 = vperm.slane %v171, 6
      %v269 = vperm.slane %v265, 2
      %v270 = vperm.slane %v266, 2
      %v271 = vmul.f32 %v251, %v269
      %v272 = vmul.f32 %v251, %v270
      %v273 = vmul.f32 %v255, %v269
      %v274 = vmul.f32 %v255, %v270
      %v275 = vmul.f32 %v259, %v269
      %v276 = vmul.f32 %v259, %v270
      %v277 = vmul.f32 %v263, %v269
      %v278 = vmul.f32 %v263, %v270
      %v279 = vadd.f32 %v241, %v271
      %v280 = vadd.f32 %v242, %v272
      %v281 = vadd.f32 %v243, %v273
      %v282 = vadd.f32 %v244, %v274
      %v283 = vadd.f32 %v245, %v275
      %v284 = vadd.f32 %v246, %v276
      %v285 = vadd.f32 %v247, %v277
      %v286 = vadd.f32 %v248, %v278
      %287 = vset.pattern.permute.xlu0 3
      %288 = vperm.xlu0 %287, %v172
      %v289 = vpop.permute.xlu0 %288
      %291 = vset.pattern.permute.xlu0 3
      %292 = vperm.xlu0 %291, %v173
      %v293 = vpop.permute.xlu0 %292
      %295 = vset.pattern.permute.xlu0 3
      %296 = vperm.xlu0 %295, %v174
      %v297 = vpop.permute.xlu0 %296
      %299 = vset.pattern.permute.xlu0 3
      %300 = vperm.xlu0 %299, %v175
      %v301 = vpop.permute.xlu0 %300
      %v303 = vperm.slane %v171, 3
      %v304 = vperm.slane %v171, 7
      %v307 = vperm.slane %v303, 3
      %v308 = vperm.slane %v304, 3
      %v309 = vmul.f32 %v289, %v307
      %v310 = vmul.f32 %v289, %v308
      %v311 = vmul.f32 %v293, %v307
      %v312 = vmul.f32 %v293, %v308
      %v313 = vmul.f32 %v297, %v307
      %v314 = vmul.f32 %v297, %v308
      %v315 = vmul.f32 %v301, %v307
      %v316 = vmul.f32 %v301, %v308
      %v317 = vadd.f32 %v279, %v309
      %v318 = vadd.f32 %v280, %v310
      %v319 = vadd.f32 %v281, %v311
      %v320 = vadd.f32 %v282, %v312
      %v321 = vadd.f32 %v283, %v313
      %v322 = vadd.f32 %v284, %v314
      %v323 = vadd.f32 %v285, %v315
      %v324 = vadd.f32 %v286, %v316
      %v325 = vmax.f32 %v317, 0.0
      %v326 = vmax.f32 %v318, 0.0
      %v327 = vmax.f32 %v319, 0.0
      %v328 = vmax.f32 %v320, 0.0
      %v329 = vmax.f32 %v321, 0.0
      %v330 = vmax.f32 %v322, 0.0
      %v331 = vmax.f32 %v323, 0.0
      %v332 = vmax.f32 %v324, 0.0
      %v333 = vld [vmem:[%s2] sm:$0xff]
      %v334 = vld [vmem:[%s2 + $0x8] sm:$0xff]
      %v335 = vld [vmem:[%s2 + $0x10] sm:$0xff]
      %v336 = vld [vmem:[%s2 + $0x18] sm:$0xff]
      %vm337 = vcmask 261120
      %v339 = vsel %vm337, %v333, 0
      %v342 = vsel %vm337, %v334, 0
      %v345 = vsel %vm337, %v335, 0
      %v348 = vsel %vm337, %v336, 0
      %350 = vmatpush.msra.mxu0 0.0
      %351 = vmatpush.msra.mxu0 0.0
      %352 = vmatpush.msra.mxu0 0.0
      %353 = vmatpush.msra.mxu0 0.0
      %354 = vmatpush.msra.mxu0 0.0
      %355 = vmatpush.msra.mxu0 0.0
      %356 = vmatpush.msra.mxu0 0.0
      %357 = vmatpush.msra.mxu0 0.0
      %358 = vmatpush.msra.mxu0 0.0
      %359 = vmatpush.msra.mxu0 0.0
      %360 = vmatpush.msra.mxu0 0.0
      %361 = vmatpush.msra.mxu0 0.0
      %362 = vmatpush.msra.mxu0 %v331
      %363 = vmatpush.msra.mxu0 %v329
      %364 = vmatpush.msra.mxu0 %v327
      %365 = vmatpush.msra.mxu0 %v325
      %366 = vmatmul.f32.gmra.mxu0 %v339
      %v367 = vpop.f32.mrf.mxu0
      %v368 = vadd.f32 0.0, %v367
      %369 = vmatmul.f32.gmra.mxu0 %v342
      %v370 = vpop.f32.mrf.mxu0
      %v371 = vadd.f32 0.0, %v370
      %372 = vmatmul.f32.gmra.mxu0 %v345
      %v373 = vpop.f32.mrf.mxu0
      %v374 = vadd.f32 0.0, %v373
      %375 = vmatmul.f32.gmra.mxu0 %v348
      %v376 = vpop.f32.mrf.mxu0
      %v377 = vadd.f32 0.0, %v376
      %378 = vdwg.mxu0
      %379 = vmatpush.msra.mxu0 0.0
      %380 = vmatpush.msra.mxu0 0.0
      %381 = vmatpush.msra.mxu0 0.0
      %382 = vmatpush.msra.mxu0 0.0
      %383 = vmatpush.msra.mxu0 0.0
      %384 = vmatpush.msra.mxu0 0.0
      %385 = vmatpush.msra.mxu0 0.0
      %386 = vmatpush.msra.mxu0 0.0
      %387 = vmatpush.msra.mxu0 0.0
      %388 = vmatpush.msra.mxu0 0.0
      %389 = vmatpush.msra.mxu0 0.0
      %390 = vmatpush.msra.mxu0 0.0
      %391 = vmatpush.msra.mxu0 %v332
      %392 = vmatpush.msra.mxu0 %v330
      %393 = vmatpush.msra.mxu0 %v328
      %394 = vmatpush.msra.mxu0 %v326
      %395 = vmatmul.f32.gmra.mxu0 %v339
      %v396 = vpop.f32.mrf.mxu0
      %v397 = vadd.f32 0.0, %v396
      %398 = vmatmul.f32.gmra.mxu0 %v342
      %v399 = vpop.f32.mrf.mxu0
      %v400 = vadd.f32 0.0, %v399
      %401 = vmatmul.f32.gmra.mxu0 %v345
      %v402 = vpop.f32.mrf.mxu0
      %v403 = vadd.f32 0.0, %v402
      %404 = vmatmul.f32.gmra.mxu0 %v348
      %v405 = vpop.f32.mrf.mxu0
      %v406 = vadd.f32 0.0, %v405
      %407 = vdwg.mxu0
      %v408 = vmax.f32 %v368, 0.0
      %v409 = vmax.f32 %v397, 0.0
      %v410 = vmax.f32 %v371, 0.0
      %v411 = vmax.f32 %v400, 0.0
      %v412 = vmax.f32 %v374, 0.0
      %v413 = vmax.f32 %v403, 0.0
      %v414 = vmax.f32 %v377, 0.0
      %v415 = vmax.f32 %v406, 0.0
      %416 = vst [vmem:[%s170] sm:$0xff] %v408
      %417 = vst [vmem:[%s170 + $0x8] sm:$0xff] %v409
      %418 = vst [vmem:[%s170 + $0x10] sm:$0xff] %v410
      %419 = vst [vmem:[%s170 + $0x18] sm:$0xff] %v411
      %420 = vst [vmem:[%s170 + $0x20] sm:$0xff] %v412
      %421 = vst [vmem:[%s170 + $0x28] sm:$0xff] %v413
      %422 = vst [vmem:[%s170 + $0x30] sm:$0xff] %v414
      %423 = vst [vmem:[%s170 + $0x38] sm:$0xff] %v415
      %p424 = scmp.lt.s32.totalorder %s14, 1
      %s425 = scalar_select %p424, %s14, 1
      %s426 = smul.addr %s425, 8
      %s427 = smul.addr %s426, 8
      %s428 = scalar_lea.vmem %s3, %s427
      // Predicated region
      $region33: #{decoder_layers_forward.1} parent=31 // pred_check
        %p429 = pneg %p100
      $region34: #{decoder_layers_forward.1} parent=31 // pred_check_branch
        %431 = sbr.rel (%p429) target = $region36
      $region35: #{decoder_layers_forward.1} parent=31 // pred_region
        _
      $region36: #{decoder_layers_forward.1} parent=31 // pred_fallthru
        _
    $region32: #{decoder_layers_forward.1} parent=5 // pred_fallthru
      _
    %p432 = scmp.le.s32.totalorder 2, %s9
    // Predicated region
    $region37: #{decoder_layers_forward.1} parent=5 // pred_check
      %p433 = pneg %p432
    $region38: #{decoder_layers_forward.1} parent=5 // pred_check_branch
      %435 = sbr.rel (%p433) target = $region40
    $region39: #{decoder_layers_forward.1} parent=5 // pred_region
      %s436 = ssub.s32 %s9, 2
      // Predicated region
      $region41: #{decoder_layers_forward.1} parent=39 // pred_check
        %p437 = pneg %p106
      $region42: #{decoder_layers_forward.1} parent=39 // pred_check_branch
        %439 = sbr.rel (%p437) target = $region44
      $region43: #{decoder_layers_forward.1} parent=39 // pred_region
        %p440 = scmp.lt.s32.totalorder %s15, 1
        %s441 = scalar_select %p440, %s15, 1
        %s442 = smul.addr %s441, 8
        %s443 = smul.addr %s442, 8
        %s444 = scalar_lea.vmem %s3, %s443
      $region44: #{decoder_layers_forward.1} parent=39 // pred_fallthru
        _
    $region40: #{decoder_layers_forward.1} parent=5 // pred_fallthru
      _
  $region6: #{decoder_layers_forward.1} parent=0 // loop_footer
    %s13 = sadd.s32 1, %s9
  $region7: #{decoder_layers_forward.1} parent=0 // loop_footer_branch
    %8 = sbr.rel target = $region3
  $region8: #{decoder_layers_forward.1} parent=0 // loop_exit
    _

</llo_original>
